<compile_context>
chip_gen: v7x
topology: tpu7x:2x2x1
jax: 0.10.0
libtpu: 0.0.40
codegen_flags: <defaults>
</compile_context>

<pallas_src>
import functools

import jax
import jax.numpy as jnp
from jax import lax
from jax.experimental import pallas as pl
from jax.experimental.pallas import tpu as pltpu


def _round_up(x, m):
    return ((x + m - 1) // m) * m


def _dwconv_kernel(x_ref, p_ref, o_ref, xs_ref, *,
                   kh, kw, w, hw, l_out, data_off, tail_end,
                   rows_in, rows_out, off_dw, off_hm, skip_mask_cols):
    # x_ref:  (rows_in, H*W)   all images: (N*C) rows, lane-dense spatial
    # p_ref:  (p_rows, L)      packed params:
    #           rows [0, rows_out)            : block-diag pointwise W (cols 0..rows_in-1),
    #                                           combined bias in col rows_in
    #           rows [off_dw, off_dw+rows_in) : depthwise taps (cols 0..kh*kw-1)
    #           rows [off_hm+j*rows_in, +rows_in): hmask for tap column j (replicated,
    #                                           so no sublane broadcast is needed)
    # o_ref:  (rows_out, L)    (N*Cout) rows, lane-dense spatial
    # xs_ref: (rows_in, LS)    f32 scratch: vertically zero-padded flat images

    # Zero ONLY the pad head/tail lanes the shifted reads can touch; interior is
    # overwritten by one contiguous lane-dense copy (f32 cast happens here).
    if data_off > 0:
        xs_ref[:, 0:data_off] = jnp.zeros((rows_in, data_off), jnp.float32)
    if tail_end > data_off + hw:
        xs_ref[:, data_off + hw:tail_end] = jnp.zeros(
            (rows_in, tail_end - data_off - hw), jnp.float32)
    xs_ref[:, data_off:data_off + hw] = x_ref[...].astype(jnp.float32)
    xs = xs_ref[...]                                        # (rows_in, LS) f32

    # Depthwise conv: kh*kw static lane shifts + per-row broadcast FMAs.  Taps
    # reading across a row boundary (horizontal padding) are zeroed by the
    # per-column mask; the all-ones centre column skips the multiply entirely.
    acc = jnp.zeros((rows_in, l_out), jnp.float32)
    for j in range(kw):
        acc_j = jnp.zeros((rows_in, l_out), jnp.float32)
        for i in range(kh):
            t = i * kw + j
            shift = i * w + j
            acc_j = acc_j + (p_ref[off_dw:off_dw + rows_in, t:t + 1]
                             * xs[:, shift:shift + l_out])
        if j in skip_mask_cols:
            acc = acc + acc_j
        else:
            hm = p_ref[off_hm + j * rows_in:off_hm + (j + 1) * rows_in, :]
            acc = acc + acc_j * hm

    # Pointwise 1x1 conv as one MXU matmul with a batch-block-diagonal weight
    # matrix; depthwise bias already folded into the combined bias column.
    pw = p_ref[0:rows_out, 0:rows_in]                       # (N*Cout, N*C)
    cb = p_ref[0:rows_out, rows_in:rows_in + 1]             # (N*Cout, 1)
    out = jnp.dot(pw, acc, preferred_element_type=jnp.float32) + cb
    o_ref[...] = out.astype(o_ref.dtype)                    # lane-dense store


def dwconv_pallas(x_nchw, dw_weight, dw_bias, pw_weight, pw_bias,
                  *, stride=1, padding=0):
    """Depthwise (groups=C) conv2d + pointwise 1x1 conv, PyTorch NCHW layout.

    x_nchw:    (N, C, H, W)
    dw_weight: (C, 1, kh, kw), dw_bias: (C,)
    pw_weight: (Cout, C, 1, 1), pw_bias: (Cout,)
    returns    (N, Cout, OH, OW)
    """
    n, c, h, w = x_nchw.shape
    cout = pw_weight.shape[0]
    kh, kw = int(dw_weight.shape[2]), int(dw_weight.shape[3])
    assert dw_weight.shape[1] == 1, "depthwise conv expects one tap set per channel"

    oh = (h + 2 * padding - kh) // stride + 1
    ow = (w + 2 * padding - kw) // stride + 1
    if not (stride == 1 and oh == h and ow == w):
        # TODO(synk): general stride / non-"same" padding needs a padded-width
        # scratch plus a strided crop of the output slab; only the stride=1,
        # 2*padding == kernel_size-1 configuration this module instance uses is
        # implemented as a Pallas kernel.
        raise NotImplementedError(
            "dwconv_pallas: only stride=1 with 2*padding == kernel_size-1 supported")

    l_out = oh * ow                               # lane-dense spatial extent
    hw = h * w
    rows_in = n * c                               # batch folded into sublanes
    rows_out = n * cout
    data_off = padding * w + padding              # top pad rows + left guard
    tail_end = (kh - 1) * w + (kw - 1) + l_out    # last lane any shifted read touches
    ls = _round_up(tail_end, 128)                 # scratch lanes, full lane tiles

    assert l_out >= kh * kw and l_out >= rows_in + 1, "param packing needs wider lanes"

    # ---- Packed parameter slab (trace-time prep, tiny) ----------------------
    off_dw = _round_up(rows_out, 8)               # sublane-aligned section offsets
    off_hm = _round_up(off_dw + rows_in, 8)
    p_rows = _round_up(off_hm + kw * rows_in, 8)

    f32 = jnp.float32
    dww = dw_weight[:, 0].reshape(c, kh * kw).astype(f32)                 # (C, kh*kw)
    pww = pw_weight[:, :, 0, 0].astype(f32)                               # (Cout, C)
    cb = pww @ dw_bias.astype(f32) + pw_bias.astype(f32)                  # (Cout,)

    pww_bd = jnp.kron(jnp.eye(n, dtype=f32), pww)                         # (N*Cout, N*C)
    cb_rep = jnp.tile(cb, (n,))                                           # (N*Cout,)
    dww_rep = jnp.tile(dww, (n, 1))                                       # (N*C, kh*kw)

    col = jnp.arange(l_out, dtype=jnp.int32) % w                          # ow per lane
    tj = col[None, :] + jnp.arange(kw, dtype=jnp.int32)[:, None] - padding
    hmask = ((tj >= 0) & (tj < w)).astype(f32)                            # (kw, L)
    hmask_rep = jnp.repeat(hmask, rows_in, axis=0)                        # (kw*N*C, L)

    # Tap columns whose horizontal mask is all ones (skip the multiply in-kernel).
    skip_mask_cols = tuple(
        j for j in range(kw)
        if (0 + j - padding >= 0) and ((w - 1) + j - padding <= w - 1))

    params = jnp.zeros((p_rows, l_out), f32)
    params = params.at[0:rows_out, 0:rows_in].set(pww_bd)
    params = params.at[0:rows_out, rows_in].set(cb_rep)
    params = params.at[off_dw:off_dw + rows_in, 0:kh * kw].set(dww_rep)
    params = params.at[off_hm:off_hm + kw * rows_in, :].set(hmask_rep)

    x_flat = x_nchw.reshape(rows_in, hw)          # free metadata reshape (stays NCHW)

    kernel = functools.partial(
        _dwconv_kernel, kh=kh, kw=kw, w=w, hw=hw, l_out=l_out,
        data_off=data_off, tail_end=tail_end, rows_in=rows_in, rows_out=rows_out,
        off_dw=off_dw, off_hm=off_hm, skip_mask_cols=skip_mask_cols)

    itemsize = jnp.dtype(x_nchw.dtype).itemsize
    flops = 2 * n * l_out * (kh * kw * c + c * cout)
    bytes_accessed = (rows_in * hw * itemsize + rows_out * l_out * itemsize
                      + p_rows * l_out * 4)

    out_flat = pl.pallas_call(
        kernel,
        out_shape=jax.ShapeDtypeStruct((rows_out, l_out), x_nchw.dtype),
        grid_spec=pltpu.PrefetchScalarGridSpec(
            num_scalar_prefetch=0,
            grid=(1,),                            # single step: batch lives in sublanes
            in_specs=[
                pl.BlockSpec((rows_in, hw), lambda i: (0, 0)),
                pl.BlockSpec((p_rows, l_out), lambda i: (0, 0)),
            ],
            out_specs=pl.BlockSpec((rows_out, l_out), lambda i: (0, 0)),
            scratch_shapes=[pltpu.VMEM((rows_in, ls), jnp.float32)],
        ),
        compiler_params=pltpu.CompilerParams(
            dimension_semantics=("arbitrary",)),
        cost_estimate=pl.CostEstimate(flops=flops, transcendentals=0,
                                      bytes_accessed=bytes_accessed),
    )(x_flat, params)

    return out_flat.reshape(n, cout, oh, ow)      # free metadata reshape to NCHW


def _reference(x_nchw, dw_weight, dw_bias, pw_weight, pw_bias, *, stride, padding):
    # Pure-JAX reference using lax.conv_general_dilated (NCHW, OIHW), groups=C.
    c = x_nchw.shape[1]
    y = lax.conv_general_dilated(
        x_nchw, dw_weight, window_strides=(stride, stride),
        padding=((padding, padding), (padding, padding)),
        dimension_numbers=("NCHW", "OIHW", "NCHW"),
        feature_group_count=c)
    y = y + dw_bias.reshape(1, c, 1, 1)
    z = lax.conv_general_dilated(
        y, pw_weight, window_strides=(1, 1), padding="VALID",
        dimension_numbers=("NCHW", "OIHW", "NCHW"))
    z = z + pw_bias.reshape(1, -1, 1, 1)
    return z


if __name__ == "__main__":
    # Module config: DWConv(in_dim=4, out_dim=8, kernel_size=3, stride=1, padding=1)
    N, C, H, W = 2, 4, 16, 16
    COUT, K, STRIDE, PAD = 8, 3, 1, 1

    key = jax.random.PRNGKey(0)
    kx, k1, k2, k3, k4 = jax.random.split(key, 5)

    x = jax.random.normal(kx, (N, C, H, W), dtype=jnp.float32)
    # Deterministic synthetic parameters (shapes match nn.Conv2d weights).
    dw_weight = jax.random.normal(k1, (C, 1, K, K), dtype=jnp.float32) * 0.1
    dw_bias = jax.random.normal(k2, (C,), dtype=jnp.float32) * 0.1
    pw_weight = jax.random.normal(k3, (COUT, C, 1, 1), dtype=jnp.float32) * 0.1
    pw_bias = jax.random.normal(k4, (COUT,), dtype=jnp.float32) * 0.1

    out = dwconv_pallas(x, dw_weight, dw_bias, pw_weight, pw_bias,
                        stride=STRIDE, padding=PAD)
    out = jax.block_until_ready(out)

    ref = _reference(x, dw_weight, dw_bias, pw_weight, pw_bias,
                     stride=STRIDE, padding=PAD)
    assert out.shape == (N, COUT, H, W), out.shape
    assert jnp.allclose(out, ref, atol=1e-4, rtol=1e-4), \
        float(jnp.max(jnp.abs(out - ref)))
    print("KERNEL_OK")
</pallas_src>

<mosaic_0001>
module attributes {stable_mosaic.version = 11 : i64} {
  func.func @_dwconv_kernel(%arg0: i32, %arg1: memref<8x256xf32, #tpu.memory_space<vmem>>, %arg2: memref<48x256xf32, #tpu.memory_space<vmem>>, %arg3: memref<16x256xf32, #tpu.memory_space<vmem>>, %arg4: memref<8x384xf32, #tpu.memory_space<vmem>>) attributes {dimension_semantics = [#tpu.dimension_semantics<arbitrary>], iteration_bounds = array<i64: 1>, scalar_prefetch = 0 : i64, scratch_operands = 1 : i64, tpu.core_type = #tpu.core_type<tc>, window_params = [{pipeline_mode = #tpu.pipeline_mode<synchronous>, transform_indices = @transform_0, window_bounds = array<i64: 8, 256>}, {pipeline_mode = #tpu.pipeline_mode<synchronous>, transform_indices = @transform_1, window_bounds = array<i64: 48, 256>}, {pipeline_mode = #tpu.pipeline_mode<synchronous>, transform_indices = @transform_2, window_bounds = array<i64: 16, 256>}]} {
    %cst = arith.constant 0.000000e+00 : f32
    %0 = vector.broadcast %cst : f32 to vector<8x17xf32>
    %c0 = arith.constant 0 : index
    %c0_0 = arith.constant 0 : index
    %1 = vector.load %arg4[%c0, %c0_0] : memref<8x384xf32, #tpu.memory_space<vmem>>, vector<8x17xf32>
    tpu.vector_store %arg4[%c0, %c0_0], %0 {strides = array<i32>} : memref<8x384xf32, #tpu.memory_space<vmem>>, vector<8x17xf32>,
    %cst_1 = arith.constant 0.000000e+00 : f32
    %2 = vector.broadcast %cst_1 : f32 to vector<8x17xf32>
    %c0_2 = arith.constant 0 : index
    %c273 = arith.constant 273 : index
    %3 = vector.load %arg4[%c0_2, %c273] : memref<8x384xf32, #tpu.memory_space<vmem>>, vector<8x17xf32>
    tpu.vector_store %arg4[%c0_2, %c273], %2 {strides = array<i32>} : memref<8x384xf32, #tpu.memory_space<vmem>>, vector<8x17xf32>,
    %c0_3 = arith.constant 0 : index
    %c0_4 = arith.constant 0 : index
    %4 = vector.load %arg1[%c0_3, %c0_4] : memref<8x256xf32, #tpu.memory_space<vmem>>, vector<8x256xf32>
    %c0_5 = arith.constant 0 : index
    %c17 = arith.constant 17 : index
    %5 = vector.load %arg4[%c0_5, %c17] : memref<8x384xf32, #tpu.memory_space<vmem>>, vector<8x256xf32>
    tpu.vector_store %arg4[%c0_5, %c17], %4 {strides = array<i32>} : memref<8x384xf32, #tpu.memory_space<vmem>>, vector<8x256xf32>,
    %c0_6 = arith.constant 0 : index
    %c0_7 = arith.constant 0 : index
    %6 = vector.load %arg4[%c0_6, %c0_7] : memref<8x384xf32, #tpu.memory_space<vmem>>, vector<8x384xf32>
    %cst_8 = arith.constant 0.000000e+00 : f32
    %7 = vector.broadcast %cst_8 : f32 to vector<8x256xf32>
    %cst_9 = arith.constant 0.000000e+00 : f32
    %8 = vector.broadcast %cst_9 : f32 to vector<8x256xf32>
    %c16 = arith.constant 16 : index
    %c0_10 = arith.constant 0 : index
    %9 = vector.load %arg2[%c16, %c0_10] : memref<48x256xf32, #tpu.memory_space<vmem>>, vector<8x1xf32>
    %10 = vector.extract_strided_slice %6 {offsets = [0, 0], sizes = [8, 256], strides = [1, 1]} : vector<8x384xf32> to vector<8x256xf32>
    %11 = vector.broadcast %9 : vector<8x1xf32> to vector<8x256xf32>
    %12 = arith.mulf %11, %10 : vector<8x256xf32>
    %13 = arith.addf %8, %12 : vector<8x256xf32>
    %c16_11 = arith.constant 16 : index
    %c3 = arith.constant 3 : index
    %14 = vector.load %arg2[%c16_11, %c3] : memref<48x256xf32, #tpu.memory_space<vmem>>, vector<8x1xf32>
    %15 = vector.extract_strided_slice %6 {offsets = [0, 16], sizes = [8, 256], strides = [1, 1]} : vector<8x384xf32> to vector<8x256xf32>
    %16 = vector.broadcast %14 : vector<8x1xf32> to vector<8x256xf32>
    %17 = arith.mulf %16, %15 : vector<8x256xf32>
    %18 = arith.addf %13, %17 : vector<8x256xf32>
    %c16_12 = arith.constant 16 : index
    %c6 = arith.constant 6 : index
    %19 = vector.load %arg2[%c16_12, %c6] : memref<48x256xf32, #tpu.memory_space<vmem>>, vector<8x1xf32>
    %20 = vector.extract_strided_slice %6 {offsets = [0, 32], sizes = [8, 256], strides = [1, 1]} : vector<8x384xf32> to vector<8x256xf32>
    %21 = vector.broadcast %19 : vector<8x1xf32> to vector<8x256xf32>
    %22 = arith.mulf %21, %20 : vector<8x256xf32>
    %23 = arith.addf %18, %22 : vector<8x256xf32>
    %c24 = arith.constant 24 : index
    %c0_13 = arith.constant 0 : index
    %24 = vector.load %arg2[%c24, %c0_13] : memref<48x256xf32, #tpu.memory_space<vmem>>, vector<8x256xf32>
    %25 = arith.mulf %23, %24 : vector<8x256xf32>
    %26 = arith.addf %7, %25 : vector<8x256xf32>
    %cst_14 = arith.constant 0.000000e+00 : f32
    %27 = vector.broadcast %cst_14 : f32 to vector<8x256xf32>
    %c16_15 = arith.constant 16 : index
    %c1 = arith.constant 1 : index
    %28 = vector.load %arg2[%c16_15, %c1] : memref<48x256xf32, #tpu.memory_space<vmem>>, vector<8x1xf32>
    %29 = vector.extract_strided_slice %6 {offsets = [0, 1], sizes = [8, 256], strides = [1, 1]} : vector<8x384xf32> to vector<8x256xf32>
    %30 = vector.broadcast %28 : vector<8x1xf32> to vector<8x256xf32>
    %31 = arith.mulf %30, %29 : vector<8x256xf32>
    %32 = arith.addf %27, %31 : vector<8x256xf32>
    %c16_16 = arith.constant 16 : index
    %c4 = arith.constant 4 : index
    %33 = vector.load %arg2[%c16_16, %c4] : memref<48x256xf32, #tpu.memory_space<vmem>>, vector<8x1xf32>
    %34 = vector.extract_strided_slice %6 {offsets = [0, 17], sizes = [8, 256], strides = [1, 1]} : vector<8x384xf32> to vector<8x256xf32>
    %35 = vector.broadcast %33 : vector<8x1xf32> to vector<8x256xf32>
    %36 = arith.mulf %35, %34 : vector<8x256xf32>
    %37 = arith.addf %32, %36 : vector<8x256xf32>
    %c16_17 = arith.constant 16 : index
    %c7 = arith.constant 7 : index
    %38 = vector.load %arg2[%c16_17, %c7] : memref<48x256xf32, #tpu.memory_space<vmem>>, vector<8x1xf32>
    %39 = vector.extract_strided_slice %6 {offsets = [0, 33], sizes = [8, 256], strides = [1, 1]} : vector<8x384xf32> to vector<8x256xf32>
    %40 = vector.broadcast %38 : vector<8x1xf32> to vector<8x256xf32>
    %41 = arith.mulf %40, %39 : vector<8x256xf32>
    %42 = arith.addf %37, %41 : vector<8x256xf32>
    %43 = arith.addf %26, %42 : vector<8x256xf32>
    %cst_18 = arith.constant 0.000000e+00 : f32
    %44 = vector.broadcast %cst_18 : f32 to vector<8x256xf32>
    %c16_19 = arith.constant 16 : index
    %c2 = arith.constant 2 : index
    %45 = vector.load %arg2[%c16_19, %c2] : memref<48x256xf32, #tpu.memory_space<vmem>>, vector<8x1xf32>
    %46 = vector.extract_strided_slice %6 {offsets = [0, 2], sizes = [8, 256], strides = [1, 1]} : vector<8x384xf32> to vector<8x256xf32>
    %47 = vector.broadcast %45 : vector<8x1xf32> to vector<8x256xf32>
    %48 = arith.mulf %47, %46 : vector<8x256xf32>
    %49 = arith.addf %44, %48 : vector<8x256xf32>
    %c16_20 = arith.constant 16 : index
    %c5 = arith.constant 5 : index
    %50 = vector.load %arg2[%c16_20, %c5] : memref<48x256xf32, #tpu.memory_space<vmem>>, vector<8x1xf32>
    %51 = vector.extract_strided_slice %6 {offsets = [0, 18], sizes = [8, 256], strides = [1, 1]} : vector<8x384xf32> to vector<8x256xf32>
    %52 = vector.broadcast %50 : vector<8x1xf32> to vector<8x256xf32>
    %53 = arith.mulf %52, %51 : vector<8x256xf32>
    %54 = arith.addf %49, %53 : vector<8x256xf32>
    %c16_21 = arith.constant 16 : index
    %c8 = arith.constant 8 : index
    %55 = vector.load %arg2[%c16_21, %c8] : memref<48x256xf32, #tpu.memory_space<vmem>>, vector<8x1xf32>
    %56 = vector.extract_strided_slice %6 {offsets = [0, 34], sizes = [8, 256], strides = [1, 1]} : vector<8x384xf32> to vector<8x256xf32>
    %57 = vector.broadcast %55 : vector<8x1xf32> to vector<8x256xf32>
    %58 = arith.mulf %57, %56 : vector<8x256xf32>
    %59 = arith.addf %54, %58 : vector<8x256xf32>
    %c40 = arith.constant 40 : index
    %c0_22 = arith.constant 0 : index
    %60 = vector.load %arg2[%c40, %c0_22] : memref<48x256xf32, #tpu.memory_space<vmem>>, vector<8x256xf32>
    %61 = arith.mulf %59, %60 : vector<8x256xf32>
    %62 = arith.addf %43, %61 : vector<8x256xf32>
    %c0_23 = arith.constant 0 : index
    %c0_24 = arith.constant 0 : index
    %63 = vector.load %arg2[%c0_23, %c0_24] : memref<48x256xf32, #tpu.memory_space<vmem>>, vector<16x8xf32>
    %c0_25 = arith.constant 0 : index
    %c8_26 = arith.constant 8 : index
    %64 = vector.load %arg2[%c0_25, %c8_26] : memref<48x256xf32, #tpu.memory_space<vmem>>, vector<16x1xf32>
    %cst_27 = arith.constant dense<0.000000e+00> : vector<16x256xf32>
    %65 = tpu.matmul %63, %62, %cst_27 {dimension_numbers = #tpu.dot_dimension_numbers<[1], [0], [0], [1], [0, 0, 1, 1], [], []>} : vector<16x8xf32>, vector<8x256xf32>, vector<16x256xf32> -> vector<16x256xf32>
    %66 = vector.broadcast %64 : vector<16x1xf32> to vector<16x256xf32>
    %67 = arith.addf %65, %66 : vector<16x256xf32>
    %c0_28 = arith.constant 0 : index
    %c0_29 = arith.constant 0 : index
    %68 = vector.load %arg3[%c0_28, %c0_29] : memref<16x256xf32, #tpu.memory_space<vmem>>, vector<16x256xf32>
    tpu.vector_store %arg3[%c0_28, %c0_29], %67 {strides = array<i32>} : memref<16x256xf32, #tpu.memory_space<vmem>>, vector<16x256xf32>,
    return
  }
  func.func @transform_0(%arg0: i32) -> (i32, i32) {
    %c0_i32 = arith.constant 0 : i32
    %c0_i32_0 = arith.constant 0 : i32
    %c0_i32_1 = arith.constant 0 : i32
    return %c0_i32, %c0_i32_0 : i32, i32
  }
  func.func @transform_1(%arg0: i32) -> (i32, i32) {
    %c0_i32 = arith.constant 0 : i32
    %c0_i32_0 = arith.constant 0 : i32
    %c0_i32_1 = arith.constant 0 : i32
    return %c0_i32, %c0_i32_0 : i32, i32
  }
  func.func @transform_2(%arg0: i32) -> (i32, i32) {
    %c0_i32 = arith.constant 0 : i32
    %c0_i32_0 = arith.constant 0 : i32
    %c0_i32_1 = arith.constant 0 : i32
    return %c0_i32, %c0_i32_0 : i32, i32
  }
}

</mosaic_0001>

<llo_original>
// kernel: tpu_custom_call.1
$region0: #{tpu_custom_call.1}
  #allocation0 [shape = 'u32[]', space=smem, size = 0x4, offset = 0x4, fixed_abs, tag = 'smem constant byte address 0x4 - core index']
  #allocation1 [shape = 'u32[144,128]{1,0:T(1,128)}', space=vmem, size = 0x12000, scoped, tag = 'internal scratch']
  #allocation2 [shape = 'f32[8,384]{1,0:T(8,128)}', space=vmem, size = 0x3000, scoped, tag = 'scratch operand']
  %s0 = inlined_call_operand.hbm [shape: f32[8,256], index: 0, kind: input, shape index: {}]
  %s1 = inlined_call_operand.hbm [shape: f32[48,256], index: 1, kind: input, shape index: {}]
  %s2 = inlined_call_operand.hbm [shape: f32[16,256], index: 2, kind: output, shape index: {}]
  %s3 = sld [smem:[#allocation0]]
  $region26: #{tpu_custom_call.1} parent=0
    _
  %s5 = ssub.s32 1, %s3
  %s6 = scalar_select 0, %s5, %s3
  $region1: #{tpu_custom_call.1} parent=0
    #allocation3 [shape = 'u8[8192]{0}', space=vmem, size = 0x2000, scoped, tag = 'input window, operand 0, single buffered']
    #allocation4 [shape = 's32[1]{0}', space=sflag, size = 0x4, scoped, tag = 'scoped memory for tpu_custom_call.1']
    #allocation5 [shape = 's32[1]{0}', space=sflag, size = 0x4, scoped, tag = 'scoped memory for tpu_custom_call.1']
    #allocation6 [shape = 'u8[49152]{0}', space=vmem, size = 0xc000, scoped, tag = 'input window, operand 1, single buffered']
    #allocation7 [shape = 's32[1]{0}', space=sflag, size = 0x4, scoped, tag = 'scoped memory for tpu_custom_call.1']
    #allocation8 [shape = 'u8[16384]{0}', space=vmem, size = 0x4000, scoped, tag = 'output window, operand 0, single buffered']
    %7 = vsyncpa [#allocation4], 0
    %8 = vsyncpa [#allocation7], 0
    %9 = vsyncpa [#allocation5], 0
    // Predicated region
    $region2: #{tpu_custom_call.1} parent=1 // pred_check
      _
    $region3: #{tpu_custom_call.1} parent=1 // pred_check_branch
      %11 = sbr.rel (0) target = $region5
    $region4: #{tpu_custom_call.1} parent=1 // pred_region
      %s13 = ssub.s32 256, 256
      %14 = vsyncadd [#allocation4], %s13
      %s16 = sshll.u32 [#allocation3], 4
      %s17 = int_to_ptr.vmem [resolvable:$true] %s16
      %19 = dma.hbm_to_vmem [thread:$0]  %s0, 256, %s17, [#allocation4]
    $region5: #{tpu_custom_call.1} parent=1 // pred_fallthru
      _
    // Predicated region
    $region6: #{tpu_custom_call.1} parent=1 // pred_check
      _
    $region7: #{tpu_custom_call.1} parent=1 // pred_check_branch
      %21 = sbr.rel (0) target = $region9
    $region8: #{tpu_custom_call.1} parent=1 // pred_region
      %s23 = ssub.s32 1536, 1536
      %24 = vsyncadd [#allocation7], %s23
      %s25 = sshll.u32 [#allocation6], 4
      %s26 = int_to_ptr.vmem [resolvable:$true] %s25
      %31 = dma.hbm_to_vmem [thread:$0]  %s1, 1536, %s26, [#allocation7], 256, 256, 16
    $region9: #{tpu_custom_call.1} parent=1 // pred_fallthru
      _
    // Predicated region
    $region10: #{tpu_custom_call.1} parent=1 // pred_check
      _
    $region11: #{tpu_custom_call.1} parent=1 // pred_check_branch
      %33 = sbr.rel (0) target = $region13
    $region12: #{tpu_custom_call.1} parent=1 // pred_region
      %34 = dma.done [#allocation4], 256
    $region13: #{tpu_custom_call.1} parent=1 // pred_fallthru
      _
    // Predicated region
    $region14: #{tpu_custom_call.1} parent=1 // pred_check
      _
    $region15: #{tpu_custom_call.1} parent=1 // pred_check_branch
      %36 = sbr.rel (0) target = $region17
    $region16: #{tpu_custom_call.1} parent=1 // pred_region
      %37 = dma.done [#allocation7], 1536
    $region17: #{tpu_custom_call.1} parent=1 // pred_fallthru
      _
    %vm38 = vcmask 138240
    %39 = vst.msk [vmem:[#allocation2] sm:$0xff] %vm38, 0.0
    %vm40 = vcmask 277640
    %41 = vst.msk [vmem:[#allocation2 + $0x10] sm:$0xff] %vm40, 0.0
    %v42 = vld [vmem:[#allocation3] sm:$0xff]
    %v43 = vld [vmem:[#allocation3 + $0x8] sm:$0xff]
    %46 = vrot.lane.b32.xlu0 %v42, 17
    %v47 = vpop.permute.xlu0 %46
    %48 = vrot.lane.b32.xlu0 %v43, 17
    %v49 = vpop.permute.xlu0 %48
    %v50 = vsel %vm38, %v47, %v49
    %vm54 = vcmask 1047688
    %55 = vst.msk [vmem:[#allocation2] sm:$0xff] %vm54, %v47
    %56 = vst [vmem:[#allocation2 + $0x8] sm:$0xff] %v50
    %57 = vst.msk [vmem:[#allocation2 + $0x10] sm:$0xff] %vm38, %v49
    %v58 = vld [vmem:[#allocation2] sm:$0xff]
    %v59 = vld [vmem:[#allocation2 + $0x8] sm:$0xff]
    %v60 = vld [vmem:[#allocation2 + $0x10] sm:$0xff]
    %v61 = vld [vmem:[#allocation6 + $0x20] sm:$0xff]
    %63 = vset.pattern.permute.xlu0 0
    %64 = vperm.xlu0 %63, %v61
    %v65 = vpop.permute.xlu0 %64
    %v67 = vmul.f32 %v65, %v58
    %v68 = vmul.f32 %v65, %v59
    %v69 = vadd.f32 %v67, 0.0
    %v70 = vadd.f32 %v68, 0.0
    %71 = vset.pattern.permute.xlu0 3
    %72 = vperm.xlu0 %71, %v61
    %v73 = vpop.permute.xlu0 %72
    %v75 = vmul.f32 %v73, %v58
    %v76 = vmul.f32 %v73, %v59
    %v77 = vmul.f32 %v73, %v60
    %81 = vrot.lane.b32.xlu0 %v75, 112
    %v82 = vpop.permute.xlu0 %81
    %83 = vrot.lane.b32.xlu0 %v76, 112
    %v84 = vpop.permute.xlu0 %83
    %85 = vrot.lane.b32.xlu0 %v77, 112
    %v86 = vpop.permute.xlu0 %85
    %vm87 = vcmask 916480
    %v88 = vsel %vm87, %v82, %v84
    %v89 = vsel %vm87, %v84, %v86
    %v92 = vadd.f32 %v69, %v88
    %v93 = vadd.f32 %v70, %v89
    %94 = vset.pattern.permute.xlu0 6
    %95 = vperm.xlu0 %94, %v61
    %v96 = vpop.permute.xlu0 %95
    %v98 = vmul.f32 %v96, %v58
    %v99 = vmul.f32 %v96, %v59
    %v100 = vmul.f32 %v96, %v60
    %104 = vrot.lane.b32.xlu0 %v98, 96
    %v105 = vpop.permute.xlu0 %104
    %106 = vrot.lane.b32.xlu0 %v99, 96
    %v107 = vpop.permute.xlu0 %106
    %108 = vrot.lane.b32.xlu0 %v100, 96
    %v109 = vpop.permute.xlu0 %108
    %vm110 = vcmask 785408
    %v111 = vsel %vm110, %v105, %v107
    %v112 = vsel %vm110, %v107, %v109
    %v115 = vadd.f32 %v92, %v111
    %v116 = vadd.f32 %v93, %v112
    %v117 = vld [vmem:[#allocation6 + $0x30] sm:$0xff]
    %v118 = vld [vmem:[#allocation6 + $0x38] sm:$0xff]
    %v119 = vmul.f32 %v115, %v117
    %v120 = vmul.f32 %v116, %v118
    %v121 = vadd.f32 %v119, 0.0
    %v122 = vadd.f32 %v120, 0.0
    %123 = vset.pattern.permute.xlu0 1
    %124 = vperm.xlu0 %123, %v61
    %v125 = vpop.permute.xlu0 %124
    %v127 = vmul.f32 %v125, %v58
    %v128 = vmul.f32 %v125, %v59
    %v129 = vmul.f32 %v125, %v60
    %v130 = vadd.f32 %v127, 0.0
    %v131 = vadd.f32 %v128, 0.0
    %v132 = vadd.f32 %v129, 0.0
    %133 = vset.pattern.permute.xlu0 4
    %134 = vperm.xlu0 %133, %v61
    %v135 = vpop.permute.xlu0 %134
    %v137 = vmul.f32 %v135, %v58
    %v138 = vmul.f32 %v135, %v59
    %v139 = vmul.f32 %v135, %v60
    %143 = vrot.lane.b32.xlu0 %v137, 112
    %v144 = vpop.permute.xlu0 %143
    %145 = vrot.lane.b32.xlu0 %v138, 112
    %v146 = vpop.permute.xlu0 %145
    %147 = vrot.lane.b32.xlu0 %v139, 112
    %v148 = vpop.permute.xlu0 %147
    %v149 = vsel %vm87, %v144, %v146
    %v150 = vsel %vm87, %v146, %v148
    %v154 = vadd.f32 %v130, %v149
    %v155 = vadd.f32 %v131, %v150
    %v156 = vadd.f32 %v132, %v148
    %157 = vset.pattern.permute.xlu0 7
    %158 = vperm.xlu0 %157, %v61
    %v159 = vpop.permute.xlu0 %158
    %v161 = vmul.f32 %v159, %v58
    %v162 = vmul.f32 %v159, %v59
    %v163 = vmul.f32 %v159, %v60
    %167 = vrot.lane.b32.xlu0 %v161, 96
    %v168 = vpop.permute.xlu0 %167
    %169 = vrot.lane.b32.xlu0 %v162, 96
    %v170 = vpop.permute.xlu0 %169
    %171 = vrot.lane.b32.xlu0 %v163, 96
    %v172 = vpop.permute.xlu0 %171
    %v173 = vsel %vm110, %v168, %v170
    %v174 = vsel %vm110, %v170, %v172
    %v178 = vadd.f32 %v154, %v173
    %v179 = vadd.f32 %v155, %v174
    %v180 = vadd.f32 %v156, %v172
    %184 = vrot.lane.b32.xlu0 %v178, 127
    %v185 = vpop.permute.xlu0 %184
    %186 = vrot.lane.b32.xlu0 %v179, 127
    %v187 = vpop.permute.xlu0 %186
    %188 = vrot.lane.b32.xlu0 %v180, 127
    %v189 = vpop.permute.xlu0 %188
    %vm190 = vcmask 1039360
    %v191 = vsel %vm190, %v185, %v187
    %v192 = vsel %vm190, %v187, %v189
    %v195 = vadd.f32 %v121, %v191
    %v196 = vadd.f32 %v122, %v192
    %197 = vset.pattern.permute.xlu0 2
    %198 = vperm.xlu0 %197, %v61
    %v199 = vpop.permute.xlu0 %198
    %v201 = vmul.f32 %v199, %v58
    %v202 = vmul.f32 %v199, %v59
    %v203 = vmul.f32 %v199, %v60
    %v204 = vadd.f32 %v201, 0.0
    %v205 = vadd.f32 %v202, 0.0
    %v206 = vadd.f32 %v203, 0.0
    %207 = vset.pattern.permute.xlu0 5
    %208 = vperm.xlu0 %207, %v61
    %v209 = vpop.permute.xlu0 %208
    %v211 = vmul.f32 %v209, %v58
    %v212 = vmul.f32 %v209, %v59
    %v213 = vmul.f32 %v209, %v60
    %217 = vrot.lane.b32.xlu0 %v211, 112
    %v218 = vpop.permute.xlu0 %217
    %219 = vrot.lane.b32.xlu0 %v212, 112
    %v220 = vpop.permute.xlu0 %219
    %221 = vrot.lane.b32.xlu0 %v213, 112
    %v222 = vpop.permute.xlu0 %221
    %v223 = vsel %vm87, %v218, %v220
    %v224 = vsel %vm87, %v220, %v222
    %v228 = vadd.f32 %v204, %v223
    %v229 = vadd.f32 %v205, %v224
    %v230 = vadd.f32 %v206, %v222
    %231 = vset.pattern.permute.xlu0 8
    %232 = vperm.xlu0 %231, %v61
    %v233 = vpop.permute.xlu0 %232
    %v235 = vmul.f32 %v233, %v58
    %v236 = vmul.f32 %v233, %v59
    %v237 = vmul.f32 %v233, %v60
    %241 = vrot.lane.b32.xlu0 %v235, 96
    %v242 = vpop.permute.xlu0 %241
    %243 = vrot.lane.b32.xlu0 %v236, 96
    %v244 = vpop.permute.xlu0 %243
    %245 = vrot.lane.b32.xlu0 %v237, 96
    %v246 = vpop.permute.xlu0 %245
    %v247 = vsel %vm110, %v242, %v244
    %v248 = vsel %vm110, %v244, %v246
    %v252 = vadd.f32 %v228, %v247
    %v253 = vadd.f32 %v229, %v248
    %v254 = vadd.f32 %v230, %v246
    %v255 = vld [vmem:[#allocation6 + $0x50] sm:$0xff]
    %v256 = vld [vmem:[#allocation6 + $0x58] sm:$0xff]
    %259 = vrot.lane.b32.xlu0 %v255, 2
    %v260 = vpop.permute.xlu0 %259
    %261 = vrot.lane.b32.xlu0 %v256, 2
    %v262 = vpop.permute.xlu0 %261
    %vm263 = vcmask 15360
    %v264 = vsel %vm263, %v260, %v262
    %v268 = vmul.f32 %v252, %v260
    %v269 = vmul.f32 %v253, %v264
    %v270 = vmul.f32 %v254, %v262
    %274 = vrot.lane.b32.xlu0 %v268, 126
    %v275 = vpop.permute.xlu0 %274
    %276 = vrot.lane.b32.xlu0 %v269, 126
    %v277 = vpop.permute.xlu0 %276
    %278 = vrot.lane.b32.xlu0 %v270, 126
    %v279 = vpop.permute.xlu0 %278
    %vm280 = vcmask 1031168
    %v281 = vsel %vm280, %v275, %v277
    %v282 = vsel %vm280, %v277, %v279
    %v285 = vadd.f32 %v195, %v281
    %v286 = vadd.f32 %v196, %v282
    %v287 = vld [vmem:[#allocation6] sm:$0xff]
    %v288 = vld [vmem:[#allocation6 + $0x10] sm:$0xff]
    %290 = vset.pattern.permute.xlu0 8
    %291 = vperm.xlu0 %290, %v287
    %v292 = vpop.permute.xlu0 %291
    %295 = vset.pattern.permute.xlu0 8
    %296 = vperm.xlu0 %295, %v288
    %v297 = vpop.permute.xlu0 %296
    %vm299 = vcmask 64512
    %v300 = vsel %vm299, %v287, 0
    %v302 = vsel %vm299, %v288, 0
    %304 = vmatprep.subr.mxu0 %v286
    %305 = vmatpush1.msra.mxu0 %v285
    %306 = vmatprep.subr.mxu0 0.0
    %307 = vmatpush1.msra.mxu0 0.0
    %308 = vmatprep.subr.mxu0 0.0
    %309 = vmatpush1.msra.mxu0 0.0
    %310 = vmatprep.subr.mxu0 0.0
    %311 = vmatpush1.msra.mxu0 0.0
    %312 = vmatprep.subr.mxu0 0.0
    %313 = vmatpush1.msra.mxu0 0.0
    %314 = vmatprep.subr.mxu0 0.0
    %315 = vmatpush1.msra.mxu0 0.0
    %316 = vmatprep.subr.mxu0 0.0
    %317 = vmatpush1.msra.mxu0 0.0
    %318 = vmatprep.subr.mxu0 0.0
    %319 = vmatpush1.msra.mxu0 0.0
    %320 = vmatprep.subr.mxu0 0.0
    %321 = vmatpush1.msra.mxu0 0.0
    %322 = vmatprep.subr.mxu0 0.0
    %323 = vmatpush1.msra.mxu0 0.0
    %324 = vmatprep.subr.mxu0 0.0
    %325 = vmatpush1.msra.mxu0 0.0
    %326 = vmatprep.subr.mxu0 0.0
    %327 = vmatpush1.msra.mxu0 0.0
    %328 = vmatprep.subr.mxu0 0.0
    %329 = vmatpush1.msra.mxu0 0.0
    %330 = vmatprep.subr.mxu0 0.0
    %331 = vmatpush1.msra.mxu0 0.0
    %332 = vmatprep.subr.mxu0 0.0
    %333 = vmatpush1.msra.mxu0 0.0
    %334 = vmatprep.subr.mxu0 0.0
    %335 = vmatpush1.msra.mxu0 0.0
    %336 = vmatprep.subr.mxu0 0.0
    %337 = vmatpush1.msra.mxu0 0.0
    %338 = vmatprep.subr.mxu0 0.0
    %339 = vmatpush1.msra.mxu0 0.0
    %340 = vmatprep.subr.mxu0 0.0
    %341 = vmatpush1.msra.mxu0 0.0
    %342 = vmatprep.subr.mxu0 0.0
    %343 = vmatpush1.msra.mxu0 0.0
    %344 = vmatprep.subr.mxu0 0.0
    %345 = vmatpush1.msra.mxu0 0.0
    %346 = vmatprep.subr.mxu0 0.0
    %347 = vmatpush1.msra.mxu0 0.0
    %348 = vmatprep.subr.mxu0 0.0
    %349 = vmatpush1.msra.mxu0 0.0
    %350 = vmatprep.subr.mxu0 0.0
    %351 = vmatpush1.msra.mxu0 0.0
    %352 = vmatprep.subr.mxu0 0.0
    %353 = vmatpush1.msra.mxu0 0.0
    %354 = vmatprep.subr.mxu0 0.0
    %355 = vmatpush1.msra.mxu0 0.0
    %356 = vmatprep.subr.mxu0 0.0
    %357 = vmatpush1.msra.mxu0 0.0
    %358 = vmatprep.subr.mxu0 0.0
    %359 = vmatpush1.msra.mxu0 0.0
    %360 = vmatprep.subr.mxu0 0.0
    %361 = vmatpush1.msra.mxu0 0.0
    %362 = vmatprep.subr.mxu0 0.0
    %363 = vmatpush1.msra.mxu0 0.0
    %364 = vmatprep.subr.mxu0 0.0
    %365 = vmatpush1.msra.mxu0 0.0
    %366 = vmatprep.subr.mxu0 0.0
    %367 = vmatpush1.msra.mxu0 0.0
    %368 = vmatprep.mubr.f32.mxu0 0.0
    %369 = vmatmul.mubr.f32.gmra.mrb[0].mxu0 %v300
    %v370 = vpop.f32.mrb[0].mxu0
    %v371 = vadd.f32 %v292, %v370
    %v372 = vpop.f32.mrb[0].mxu0
    %v373 = vadd.f32 %v292, %v372
    %374 = vmatprep.mubr.f32.mxu0 0.0
    %375 = vmatmul.mubr.f32.gmra.mrb[0].mxu0 %v302
    %v376 = vpop.f32.mrb[0].mxu0
    %v377 = vadd.f32 %v297, %v376
    %v378 = vpop.f32.mrb[0].mxu0
    %v379 = vadd.f32 %v297, %v378
    %380 = vdwg.mxu0
    %381 = vst [vmem:[#allocation8] sm:$0xff] %v371
    %382 = vst [vmem:[#allocation8 + $0x8] sm:$0xff] %v373
    %383 = vst [vmem:[#allocation8 + $0x10] sm:$0xff] %v377
    %384 = vst [vmem:[#allocation8 + $0x18] sm:$0xff] %v379
    // Predicated region
    $region18: #{tpu_custom_call.1} parent=1 // pred_check
      _
    $region19: #{tpu_custom_call.1} parent=1 // pred_check_branch
      %386 = sbr.rel (0) target = $region21
    $region20: #{tpu_custom_call.1} parent=1 // pred_region
      %s388 = ssub.s32 512, 512
      %389 = vsyncadd [#allocation5], %s388
      %s390 = sshll.u32 [#allocation8], 4
      %s391 = int_to_ptr.vmem [resolvable:$true] %s390
      %396 = dma.vmem_to_hbm [thread:$0]  %s391, 512, %s2, [#allocation5], 256, 256, 16
    $region21: #{tpu_custom_call.1} parent=1 // pred_fallthru
      _
    // Predicated region
    $region22: #{tpu_custom_call.1} parent=1 // pred_check
      _
    $region23: #{tpu_custom_call.1} parent=1 // pred_check_branch
      %398 = sbr.rel (0) target = $region25
    $region24: #{tpu_custom_call.1} parent=1 // pred_region
      %399 = dma.done [#allocation5], 512
    $region25: #{tpu_custom_call.1} parent=1 // pred_fallthru
      _
    %400 = vsyncpa [#allocation4], 1
    %401 = vsyncpa [#allocation7], 1
    %402 = vsyncpa [#allocation5], 1

</llo_original>
